<compile_context>
chip_gen: v7x
topology: tpu7x:2x2x1
jax: 0.10.0
libtpu: 0.0.40
codegen_flags: <defaults>
</compile_context>

<pallas_src>
import functools

import jax
import jax.numpy as jnp
from jax import lax
from jax.experimental import pallas as pl
from jax.experimental.pallas import tpu as pltpu


_LANE = 128          # TPU lane width: flattened-location axis stays 128-aligned.
_MAX_TILE_L = 4096   # Large L tile: kernel is HBM/step-overhead bound; at C=80
                     # this is ~1.3 MiB/block bf16 -> trivially fits scoped VMEM.
_NEG_LOGIT = -1e4    # Padding logit: sigmoid(-1e4) == 0 -> never a candidate.


def _round_up(x, m):
    return ((x + m - 1) // m) * m


# ----------------------------------------------------------------------------
# Pallas kernel: fused dense scoring (all FPN levels concatenated along L)
# ----------------------------------------------------------------------------
def _fcos_score_kernel(x_ref, scores_ref, *, num_classes, pre_nms_thresh):
    # Block shapes:
    #   x_ref:      (1, C+1, TL) bf16  rows 0..C-1 = cls logits, row C = cness
    #   scores_ref: (1, C,   TL) bf16  masked fused score:
    #               sigmoid(cls)*sigmoid(cness) where sigmoid(cls) > thresh,
    #               else -1.0 (marks non-candidates for the glue).
    x = x_ref[...].astype(jnp.float32)           # upcast: internal math in f32
    sig = jax.nn.sigmoid(x)                      # one EUP pass over C+1 rows
    cls_sig = sig[:, :num_classes, :]            # (1, C, TL)
    cness_sig = sig[:, num_classes:, :]          # (1, 1, TL)
    fused = cls_sig * cness_sig                  # rank on squared score; sqrt
                                                 # applied to top-K only (glue)
    scores_ref[...] = jnp.where(cls_sig > pre_nms_thresh, fused,
                                -1.0).astype(scores_ref.dtype)


def fcos_scores_pallas(x_all, *, num_classes, pre_nms_thresh, tile_l):
    """x_all: (B, C+1, L) bf16, L a multiple of tile_l (multiple of 128)."""
    B, Cp1, L = x_all.shape
    assert Cp1 == num_classes + 1
    assert tile_l % _LANE == 0 and L % tile_l == 0
    n_l = L // tile_l
    kernel = functools.partial(
        _fcos_score_kernel,
        num_classes=num_classes,
        pre_nms_thresh=float(pre_nms_thresh),
    )
    return pl.pallas_call(
        kernel,
        out_shape=jax.ShapeDtypeStruct((B, num_classes, L), jnp.bfloat16),
        grid_spec=pltpu.PrefetchScalarGridSpec(
            num_scalar_prefetch=0,
            grid=(B, n_l),
            in_specs=[
                pl.BlockSpec((1, Cp1, tile_l), lambda b, l: (b, 0, l)),
            ],
            out_specs=pl.BlockSpec((1, num_classes, tile_l),
                                   lambda b, l: (b, 0, l)),
        ),
        # Both axes independent -> megacore sharding / v7x 2-TC split.
        compiler_params=pltpu.CompilerParams(
            dimension_semantics=("parallel", "parallel")),
    )(x_all)


# ----------------------------------------------------------------------------
# Fixed-size JAX glue emulating the variable-length reference semantics
# ----------------------------------------------------------------------------
def _per_level_select(scores_m, reg_l, locs_xy, *, pre_nms_top_n, min_size,
                      image_size):
    """Candidate gather + per-image pre-NMS top-k + box decode for one level.

    scores_m: (B, C, Lp) masked fused scores (bf16); -1 marks non-candidates.
    reg_l:    (B, 4, L)  raw [l, t, r, b] regressions for this level (L <= Lp).
    locs_xy:  (L, 2)     unpadded anchor locations for this level.
    """
    B, C, Lp = scores_m.shape
    L = reg_l.shape[2]
    K = min(int(pre_nms_top_n), C * Lp)
    s_flat = scores_m.reshape(B, C * Lp)             # flat index = c * Lp + l
    cand = s_flat > -0.5                             # real scores are >= 0
    n_cand = jnp.sum(cand, axis=1)                   # candidates per image
    n_sel = jnp.minimum(n_cand, pre_nms_top_n)       # clamp(max=pre_nms_top_n)

    # TODO(synk): an in-kernel candidate compaction (per-tile partial top-k)
    # would shrink this dense top_k input, but changes exact reference
    # semantics when many same-class candidates share a chunk; kept dense.
    top_vals, top_idx = lax.top_k(s_flat, K)         # (B, K), sorted desc
    rank = jnp.arange(K, dtype=n_sel.dtype)[None, :]
    valid = rank < n_sel[:, None]

    loc_idx = top_idx % Lp                           # (B, K) location index
    cls_idx = (top_idx // Lp + 1).astype(jnp.int32)  # classes are 1-based
    loc_idx_c = jnp.minimum(loc_idx, L - 1)          # padded lanes -> clamp

    # Decode + clip boxes only for the K selected candidates.
    gather_idx = jnp.broadcast_to(loc_idx_c[:, None, :], (B, 4, K))
    sel_reg = jnp.take_along_axis(reg_l, gather_idx, axis=2)   # (B, 4, K)
    sel_locs = locs_xy[loc_idx_c]                               # (B, K, 2)
    x1 = sel_locs[..., 0] - sel_reg[:, 0, :]
    y1 = sel_locs[..., 1] - sel_reg[:, 1, :]
    x2 = sel_locs[..., 0] + sel_reg[:, 2, :]
    y2 = sel_locs[..., 1] + sel_reg[:, 3, :]
    sel_boxes = jnp.stack([x1, y1, x2, y2], axis=-1)            # (B, K, 4)
    sel_boxes = jnp.clip(sel_boxes, 0.0, image_size)            # square image,
    #                                                             as in the spec

    # sqrt only on the K selected fused scores (monotone -> ranking unchanged).
    sel_scores = jnp.sqrt(jnp.maximum(top_vals.astype(jnp.float32), 0.0))

    # remove_small_boxes — applied after clipping, as in the reference.
    w = sel_boxes[:, :, 2] - sel_boxes[:, :, 0]
    h = sel_boxes[:, :, 3] - sel_boxes[:, :, 1]
    valid = valid & (w >= min_size) & (h >= min_size)
    return sel_boxes, sel_scores, cls_idx, valid


def _select_single_image(boxes, scores, classes, valid, *,
                         nms_thresh, fpn_post_nms_top_n, pre_nms_thresh):
    """Padded class-agnostic NMS (torchvision.ops.nms, as in the spec)
    + kthvalue-style cap + final confidence threshold."""
    N = boxes.shape[0]
    s = jnp.where(valid, scores, -1.0)
    order = jnp.argsort(-s)
    b = boxes[order]
    s = s[order]
    c = classes[order]
    v = valid[order]

    x1, y1, x2, y2 = b[:, 0], b[:, 1], b[:, 2], b[:, 3]
    area = (x2 - x1) * (y2 - y1)
    xx1 = jnp.maximum(x1[:, None], x1[None, :])
    yy1 = jnp.maximum(y1[:, None], y1[None, :])
    xx2 = jnp.minimum(x2[:, None], x2[None, :])
    yy2 = jnp.minimum(y2[:, None], y2[None, :])
    inter = jnp.maximum(xx2 - xx1, 0.0) * jnp.maximum(yy2 - yy1, 0.0)
    union = area[:, None] + area[None, :] - inter
    iou = jnp.where(union > 0.0, inter / union, 0.0)

    idx = jnp.arange(N)

    # TODO(synk): serial greedy NMS emulation (O(N) fori_loop over O(N^2) IoU);
    # no exact parallel/bitmask equivalent that preserves greedy semantics.
    def body(i, keep):
        suppress = keep[i] & (iou[i] > nms_thresh) & (idx > i)
        return keep & jnp.logical_not(suppress)

    keep = lax.fori_loop(0, N, body, v)
    keep = keep & v

    # Cap to fpn_post_nms_top_n (kthvalue-threshold semantics of the reference).
    if 0 < fpn_post_nms_top_n < N:
        ndet = jnp.sum(keep)
        picked_sorted = jnp.sort(jnp.where(keep, s, -jnp.inf))[::-1]
        image_thresh = picked_sorted[fpn_post_nms_top_n - 1]
        keep = jnp.where(ndet > fpn_post_nms_top_n,
                         keep & (s >= image_thresh), keep)

    # Final confidence threshold on sqrt-fused score (present in the
    # reference's select_over_all_levels).
    keep = keep & (s >= pre_nms_thresh)
    return b, s, c, keep


class FCOSPostProcessorPallas:
    """JAX/Pallas re-implementation of FCOSPostProcessor.forward.

    Outputs are fixed-size padded arrays (boxes, scores, classes, keep_mask)
    per image instead of PyTorch's variable-length lists.
    """

    def __init__(self, locs_info, pre_nms_thresh, pre_nms_top_n, nms_thresh,
                 fpn_post_nms_top_n, min_size, num_classes):
        self.pre_nms_thresh = float(pre_nms_thresh)
        self.pre_nms_top_n = int(pre_nms_top_n)
        self.nms_thresh = float(nms_thresh)
        self.fpn_post_nms_top_n = int(fpn_post_nms_top_n)
        self.min_size = float(min_size)
        self.num_classes = int(num_classes)
        locs_per_level, _bb_sizes_per_level, num_locs_per_level = locs_info
        self.locations = jnp.concatenate(locs_per_level, axis=0)   # (sum L, 2)
        self.num_locs_per_level = list(num_locs_per_level)

        # Unpadded per-level locations (used only for the K selected boxes)
        # and lane-padded per-level lengths (for slicing kernel output).
        self._level_locs, self._level_pad_lens, off = [], [], 0
        for n in self.num_locs_per_level:
            self._level_locs.append(
                self.locations[off:off + n].astype(jnp.float32))    # (n, 2)
            self._level_pad_lens.append(_round_up(n, _LANE))
            off += n

    def __call__(self, cls_preds, reg_preds, cness_preds, image_size):
        B = cls_preds[0].shape[0]
        C = self.num_classes

        # Build the single kernel input: per level, fold the bf16 cast and the
        # cness channel into the same pad/concat copy (cls||cness along C).
        # Reg stays in raw per-level (B,4,H*W) form; the glue gathers it only
        # at the K selected locations (no dense decode in the kernel).
        x_chunks, reg_levels = [], []
        for cls_p, reg_p, cness_p, lp in zip(
                cls_preds, reg_preds, cness_preds, self._level_pad_lens):
            Bc, Cc, H, W = cls_p.shape
            L = H * W
            cls_l = cls_p.reshape(Bc, Cc, L).astype(jnp.bfloat16)
            cness_l = cness_p.reshape(Bc, 1, L).astype(jnp.bfloat16)
            x_l = jnp.concatenate([cls_l, cness_l], axis=1)   # (B, C+1, L)
            pad = lp - L
            if pad:
                # Padded logits very negative -> sigmoid==0 -> never candidates.
                x_l = jnp.pad(x_l, ((0, 0), (0, 0), (0, pad)),
                              constant_values=_NEG_LOGIT)
            x_chunks.append(x_l)
            reg_levels.append(reg_p.reshape(Bc, 4, L))
        x_all = jnp.concatenate(x_chunks, axis=2)             # (B, C+1, sum lp)
        l_total = x_all.shape[2]                               # multiple of 128

        # Tile selection: as large as possible (step-overhead bound), split
        # evenly so there is minimal tail padding; keep >= 2 grid steps when
        # B == 1 so both v7x TensorCores get "parallel" work.
        max_tile = _MAX_TILE_L
        if B == 1 and l_total > _LANE:
            max_tile = min(max_tile, _round_up((l_total + 1) // 2, _LANE))
        n_l = -(-l_total // min(max_tile, l_total))
        tile_l = _round_up(-(-l_total // n_l), _LANE)
        l_grid = n_l * tile_l
        tail = l_grid - l_total
        if tail:
            x_all = jnp.pad(x_all, ((0, 0), (0, 0), (0, tail)),
                            constant_values=_NEG_LOGIT)

        # One fused Pallas kernel over all levels.
        scores_m = fcos_scores_pallas(
            x_all, num_classes=C, pre_nms_thresh=self.pre_nms_thresh,
            tile_l=tile_l)

        # Per-level pre-NMS top-k + box decode on the K selected (matches the
        # per-feature-map selection of the reference), then concatenate levels
        # and run per-image NMS.
        all_b, all_s, all_c, all_v = [], [], [], []
        off = 0
        for lvl, lp in enumerate(self._level_pad_lens):
            s_lvl = lax.slice_in_dim(scores_m, off, off + lp, axis=2)
            off += lp
            b_k, s_k, c_k, v_k = _per_level_select(
                s_lvl, reg_levels[lvl], self._level_locs[lvl],
                pre_nms_top_n=self.pre_nms_top_n, min_size=self.min_size,
                image_size=float(image_size))
            all_b.append(b_k)
            all_s.append(s_k)
            all_c.append(c_k)
            all_v.append(v_k)

        boxes_cat = jnp.concatenate(all_b, axis=1)     # (B, levels*K, 4)
        scores_cat = jnp.concatenate(all_s, axis=1)    # (B, levels*K)
        classes_cat = jnp.concatenate(all_c, axis=1)
        valid_cat = jnp.concatenate(all_v, axis=1)

        select_fn = functools.partial(
            _select_single_image,
            nms_thresh=self.nms_thresh,
            fpn_post_nms_top_n=self.fpn_post_nms_top_n,
            pre_nms_thresh=self.pre_nms_thresh)
        out_boxes, out_scores, out_classes, out_keep = jax.vmap(select_fn)(
            boxes_cat, scores_cat, classes_cat, valid_cat)
        return out_boxes, out_scores, out_classes, out_keep


# ----------------------------------------------------------------------------
# Deterministic setup + smoke test
# ----------------------------------------------------------------------------
def make_locations(h, w, stride):
    ys = (jnp.arange(h, dtype=jnp.float32) + 0.5) * stride
    xs = (jnp.arange(w, dtype=jnp.float32) + 0.5) * stride
    xg, yg = jnp.meshgrid(xs, ys)                      # row-major over (y, x)
    return jnp.stack([xg.reshape(-1), yg.reshape(-1)], axis=1)   # (H*W, 2)


if __name__ == "__main__":
    key = jax.random.PRNGKey(0)

    B, C = 2, 4
    image_size = 128
    # (H, W, stride) per FPN level
    level_shapes = [(16, 16, 8), (8, 8, 16)]

    locs_per_level = [make_locations(h, w, s) for h, w, s in level_shapes]
    num_locs_per_level = [h * w for h, w, _ in level_shapes]
    bb_sizes_per_level = [None] * len(level_shapes)    # unused by forward

    post = FCOSPostProcessorPallas(
        (locs_per_level, bb_sizes_per_level, num_locs_per_level),
        pre_nms_thresh=0.3,
        pre_nms_top_n=64,
        nms_thresh=0.6,
        fpn_post_nms_top_n=32,
        min_size=0.0,
        num_classes=C,
    )

    keys = jax.random.split(key, 3 * len(level_shapes))
    cls_preds, reg_preds, cness_preds = [], [], []
    for i, (h, w, _) in enumerate(level_shapes):
        k1, k2, k3 = keys[3 * i], keys[3 * i + 1], keys[3 * i + 2]
        cls_preds.append(jax.random.normal(k1, (B, C, h, w), jnp.float32))
        reg_preds.append(
            jnp.abs(jax.random.normal(k2, (B, 4, h, w), jnp.float32)) * 10.0)
        cness_preds.append(jax.random.normal(k3, (B, 1, h, w), jnp.float32))

    out_boxes, out_scores, out_classes, out_keep = post(
        cls_preds, reg_preds, cness_preds, image_size)
    jax.block_until_ready((out_boxes, out_scores, out_classes, out_keep))

    # TODO(synk): true variable-length per-image outputs (torch .nonzero lists,
    # dynamic NMS keep lists) are represented as padded arrays + boolean mask.
    print("KERNEL_OK")
</pallas_src>

<mosaic_0001>
module attributes {stable_mosaic.version = 11 : i64} {
  func.func @_fcos_score_kernel(%arg0: i32, %arg1: i32, %arg2: memref<1x5x384xbf16, #tpu.memory_space<vmem>>, %arg3: memref<1x4x384xbf16, #tpu.memory_space<vmem>>) attributes {dimension_semantics = [#tpu.dimension_semantics<parallel>, #tpu.dimension_semantics<parallel>], iteration_bounds = array<i64: 2, 1>, scalar_prefetch = 0 : i64, scratch_operands = 0 : i64, tpu.core_type = #tpu.core_type<tc>, window_params = [{transform_indices = @transform_0, window_bounds = array<i64: 1, 5, 384>}, {transform_indices = @transform_1, window_bounds = array<i64: 1, 4, 384>}]} {
    %c0 = arith.constant 0 : index
    %c0_0 = arith.constant 0 : index
    %c0_1 = arith.constant 0 : index
    %0 = vector.load %arg2[%c0, %c0_0, %c0_1] : memref<1x5x384xbf16, #tpu.memory_space<vmem>>, vector<1x5x384xbf16>
    %1 = arith.extf %0 : vector<1x5x384xbf16> to vector<1x5x384xf32>
    %2 = arith.negf %1 : vector<1x5x384xf32>
    %3 = math.exp %2 : vector<1x5x384xf32>
    %cst = arith.constant 1.000000e+00 : f32
    %4 = vector.broadcast %cst : f32 to vector<1x5x384xf32>
    %5 = arith.addf %4, %3 : vector<1x5x384xf32>
    %6 = arith.divf %4, %5 : vector<1x5x384xf32>
    %7 = vector.extract_strided_slice %6 {offsets = [0, 0, 0], sizes = [1, 4, 384], strides = [1, 1, 1]} : vector<1x5x384xf32> to vector<1x4x384xf32>
    %8 = vector.extract_strided_slice %6 {offsets = [0, 4, 0], sizes = [1, 1, 384], strides = [1, 1, 1]} : vector<1x5x384xf32> to vector<1x1x384xf32>
    %9 = vector.broadcast %8 : vector<1x1x384xf32> to vector<1x4x384xf32>
    %10 = arith.mulf %7, %9 : vector<1x4x384xf32>
    %cst_2 = arith.constant 3.000000e-01 : f32
    %11 = vector.broadcast %cst_2 : f32 to vector<1x4x384xf32>
    %12 = arith.cmpf ogt, %7, %11 : vector<1x4x384xf32>
    %cst_3 = arith.constant -1.000000e+00 : f32
    %13 = vector.broadcast %cst_3 : f32 to vector<1x4x384xf32>
    %14 = arith.select %12, %10, %13 : vector<1x4x384xi1>, vector<1x4x384xf32>
    %15 = arith.truncf %14 : vector<1x4x384xf32> to vector<1x4x384xbf16>
    %c0_4 = arith.constant 0 : index
    %c0_5 = arith.constant 0 : index
    %c0_6 = arith.constant 0 : index
    %16 = vector.load %arg3[%c0_4, %c0_5, %c0_6] : memref<1x4x384xbf16, #tpu.memory_space<vmem>>, vector<1x4x384xbf16>
    tpu.vector_store %arg3[%c0_4, %c0_5, %c0_6], %15 {strides = array<i32>} : memref<1x4x384xbf16, #tpu.memory_space<vmem>>, vector<1x4x384xbf16>,
    return
  }
  func.func @transform_0(%arg0: i32, %arg1: i32) -> (i32, i32, i32) {
    %c0_i32 = arith.constant 0 : i32
    %c0_i32_0 = arith.constant 0 : i32
    return %arg0, %c0_i32, %arg1 : i32, i32, i32
  }
  func.func @transform_1(%arg0: i32, %arg1: i32) -> (i32, i32, i32) {
    %c0_i32 = arith.constant 0 : i32
    %c0_i32_0 = arith.constant 0 : i32
    return %arg0, %c0_i32, %arg1 : i32, i32, i32
  }
}

</mosaic_0001>

<llo_original>
// kernel: tpu_custom_call.1
$region0: #{tpu_custom_call.1}
  #allocation0 [shape = 'u32[]', space=smem, size = 0x4, offset = 0x4, fixed_abs, tag = 'smem constant byte address 0x4 - core index']
  #allocation1 [shape = 'u32[144,128]{1,0:T(1,128)}', space=vmem, size = 0x12000, scoped, tag = 'internal scratch']
  %s0 = inlined_call_operand.vmem [shape: bf16[2,5,384], index: 0, kind: input, shape index: {}]
  %s1 = inlined_call_operand.hbm [shape: bf16[2,4,384], index: 1, kind: output, shape index: {}]
  %s2 = sld [smem:[#allocation0]]
  $region37: #{tpu_custom_call.1} parent=0
    _
  %s4 = ssub.s32 1, %s2
  %s5 = scalar_select 0, %s4, %s2
  $region1: #{tpu_custom_call.1} parent=0
    #allocation2 [shape = 'u8[6144]{0}', space=vmem, size = 0x1800, scoped, tag = 'output window, operand 0']
    #allocation3 [shape = 's32[2]{0}', space=sflag, size = 0x8, scoped, tag = 'scoped memory for tpu_custom_call.1']
    %6 = vsyncpa [#allocation3], 0
    %s7 = scalar_lea.sflag [#allocation3], 1
    %8 = vsyncpa %s7, 0
    loop: start=0, step=1, limit=4
    $region2: #{tpu_custom_call.1} parent=1 // loop_pre_header
      _
    $region3: #{tpu_custom_call.1} parent=1 // loop_header
      %s10 = sphi 0, %s14
      %p11 = scmp.ge.s32.totalorder %s10, 4
      %s17 = sphi 0, %s29
      %s18 = sphi 0, %s25
      %s19 = sphi 0, %s17
      %s20 = sphi 0, %s18
      %s21 = sphi 0, %s19
      %s22 = sphi 0, %s20
      %s34 = sphi 0, %s36
      %s37 = sphi 0, %s34
      %s38 = sphi 0, %s37
      %s54 = sphi 0, %s38
      %s62 = sphi 0, %s64
      %s65 = sphi 0, %s62
      %s66 = sphi 0, %s65
      %s82 = sphi 0, %s66
    $region4: #{tpu_custom_call.1} parent=1 // loop_header_branch
      %13 = sbr.rel (%p11) target = $region8
    $region5: #{tpu_custom_call.1} parent=1 // loop_body
      %s15 = ssub.s32 %s10, 1
      %s16 = ssub.s32 %s10, 2
      %s23 = sadd.s32 1, %s18
      %p24 = scmp.ge.s32.totalorder %s23, 1
      %s25 = scalar_select %p24, 0, %s23
      %s26 = sadd.s32 1, %s17
      %s27 = scalar_select %p24, %s26, %s17
      %p28 = scmp.ge.s32.totalorder %s27, 2
      %s29 = scalar_select %p28, 0, %s27
      %s30 = ssub.s32 %s17, %s29
      %s31 = ssub.s32 %s18, %s25
      %s32 = sor.u32 %s30, %s31
      %p33 = scmp.eq.s32.totalorder %s32, 0
      %s35 = sadd.s32 %s34, 1
      %s36 = scalar_select %p33, %s34, %s35
      %p39 = pneg %p33
      %p40 = scmp.eq.s32.totalorder %s10, 1
      %p41 = por %p39, %p40
      %p42 = scmp.ne.s32.totalorder %s34, %s37
      %p43 = scmp.eq.s32.totalorder %s10, 0
      %p44 = por %p42, %p43
      %p45 = scmp.ne.s32.totalorder %s34, %s37
      %p46 = scmp.eq.s32.totalorder %s15, 1
      %p47 = por %p45, %p46
      %p48 = scmp.ne.s32.totalorder %s37, %s38
      %p49 = scmp.eq.s32.totalorder %s15, 0
      %p50 = por %p48, %p49
      %p51 = scmp.ne.s32.totalorder %s37, %s38
      %p52 = scmp.eq.s32.totalorder %s16, 1
      %p53 = por %p51, %p52
      %p55 = scmp.ne.s32.totalorder %s38, %s54
      %p56 = scmp.eq.s32.totalorder %s16, 0
      %p57 = por %p55, %p56
      %s58 = ssub.s32 %s17, %s29
      %s59 = ssub.s32 %s18, %s25
      %s60 = sor.u32 %s58, %s59
      %p61 = scmp.eq.s32.totalorder %s60, 0
      %s63 = sadd.s32 %s62, 1
      %s64 = scalar_select %p61, %s62, %s63
      %p67 = pneg %p61
      %p68 = scmp.eq.s32.totalorder %s10, 1
      %p69 = por %p67, %p68
      %p70 = scmp.ne.s32.totalorder %s62, %s65
      %p71 = scmp.eq.s32.totalorder %s10, 0
      %p72 = por %p70, %p71
      %p73 = scmp.ne.s32.totalorder %s62, %s65
      %p74 = scmp.eq.s32.totalorder %s15, 1
      %p75 = por %p73, %p74
      %p76 = scmp.ne.s32.totalorder %s65, %s66
      %p77 = scmp.eq.s32.totalorder %s15, 0
      %p78 = por %p76, %p77
      %p79 = scmp.ne.s32.totalorder %s65, %s66
      %p80 = scmp.eq.s32.totalorder %s16, 1
      %p81 = por %p79, %p80
      %p83 = scmp.ne.s32.totalorder %s66, %s82
      %p84 = scmp.eq.s32.totalorder %s16, 0
      %p85 = por %p83, %p84
      %p86 = scmp.le.s32.totalorder 1, %s10
      %p87 = scmp.lt.s32.totalorder %s10, 3
      %p88 = pnand %p86, %p87
      %p89 = pneg %p88
      // Predicated region
      $region9: #{tpu_custom_call.1} parent=5 // pred_check
        _
      $region10: #{tpu_custom_call.1} parent=5 // pred_check_branch
        %91 = sbr.rel (%p88) target = $region12
      $region11: #{tpu_custom_call.1} parent=5 // pred_region
        %s92 = ssub.s32 %s10, 1
      $region12: #{tpu_custom_call.1} parent=5 // pred_fallthru
        _
      %p93 = scmp.lt.s32.totalorder %s10, 2
      // Predicated region
      $region13: #{tpu_custom_call.1} parent=5 // pred_check
        %p94 = pneg %p93
      $region14: #{tpu_custom_call.1} parent=5 // pred_check_branch
        %96 = sbr.rel (%p94) target = $region16
      $region15: #{tpu_custom_call.1} parent=5 // pred_region
        // Predicated region
        $region17: #{tpu_custom_call.1} parent=15 // pred_check
          %p97 = pneg %p44
        $region18: #{tpu_custom_call.1} parent=15 // pred_check_branch
          %99 = sbr.rel (%p97) target = $region20
        $region19: #{tpu_custom_call.1} parent=15 // pred_region
          %s100 = smul.u32 3, %s18
          %p101 = scmp.lt.s32.totalorder %s17, 1
          %s102 = scalar_select %p101, %s17, 1
          %p103 = scmp.lt.s32.totalorder %s100, 2
          %s104 = scalar_select %p103, %s100, 2
          %s105 = smul.addr %s102, 3
          %s106 = sadd.s32 %s104, %s105
          %s107 = smul.addr %s106, 4
          %s108 = scalar_lea.vmem %s0, %s107
          %s109 = smul.u32 3, %s18
        $region20: #{tpu_custom_call.1} parent=15 // pred_fallthru
          _
      $region16: #{tpu_custom_call.1} parent=5 // pred_fallthru
        _
      %p110 = scmp.le.s32.totalorder 1, %s10
      %p111 = scmp.lt.s32.totalorder %s10, 3
      %p112 = pnand %p110, %p111
      %p113 = pneg %p112
      // Predicated region
      $region21: #{tpu_custom_call.1} parent=5 // pred_check
        _
      $region22: #{tpu_custom_call.1} parent=5 // pred_check_branch
        %115 = sbr.rel (%p112) target = $region24
      $region23: #{tpu_custom_call.1} parent=5 // pred_region
        %s116 = ssub.s32 %s10, 1
        %s117 = smul.u32 3, %s20
        %p118 = scmp.lt.s32.totalorder %s19, 1
        %s119 = scalar_select %p118, %s19, 1
        %p120 = scmp.lt.s32.totalorder %s117, 2
        %s121 = scalar_select %p120, %s117, 2
        %s122 = smul.addr %s119, 3
        %s123 = sadd.s32 %s121, %s122
        %s124 = smul.addr %s123, 4
        %s125 = scalar_lea.vmem %s0, %s124
        %p126 = pneg %p50
        %p127 = pneg %p47
        %p128 = pneg %p78
        %p129 = pneg %p75
        %s130 = sand.u32 %s65, 1
        %s131 = scalar_lea.sflag [#allocation3], %s130
        %s132 = sand.u32 %s65, 1
        %s133 = smul.addr %s132, 6
        %s134 = scalar_lea.vmem [#allocation2], %s133
        %s135 = smul.u32 3, %s20
        %p136 = scmp.lt.s32.totalorder %s19, 1
        %s137 = scalar_select %p136, %s19, 1
        %p138 = scmp.lt.s32.totalorder %s135, 2
        %s139 = scalar_select %p138, %s135, 2
        %s140 = smul.addr %s137, 3
        %s141 = sadd.s32 %s139, %s140
        %s142 = smul.addr %s141, 4
        %s143 = scalar_lea.vmem %s0, %s142
        %s144 = smul.u32 3, %s20
        %s145 = smul.u32 3, %s20
        %v146 = vld [vmem:[%s143] sm:$0x77]
        %v147 = vld [vmem:[%s143 + $0x8] sm:$0x7]
        %v148 = vunpack.c.l.bf16 %v146
        %v149 = vunpack.c.h.bf16 %v146
        %v150 = vunpack.c.l.bf16 %v147
        %v151 = vxor.u32 %v148, 2147483648
        %v152 = vxor.u32 %v149, 2147483648
        %v153 = vxor.u32 %v150, 2147483648
        %v154 = vmul.f32 %v151, 1.442695
        %v155 = vpow.pop %v154
        %v156 = vmul.f32 %v152, 1.442695
        %v157 = vpow.pop %v156
        %v158 = vmul.f32 %v153, 1.442695
        %v159 = vpow.pop %v158
        %v160 = vadd.f32 %v155, 1.0
        %v161 = vadd.f32 %v157, 1.0
        %v162 = vadd.f32 %v159, 1.0
        %v163 = vrcp.pop %v160
        %v164 = vmul.f32 1.0, %v163
        %v165 = vrcp.pop %v161
        %v166 = vmul.f32 1.0, %v165
        %v167 = vrcp.pop %v162
        %v168 = vmul.f32 1.0, %v167
        %v169 = vlaneseq
        %v170 = vshrl.u32 %v169, 7
        %v171 = vsub.s32 4, %v170
        %v172 = vrot.slane %v164, %v171
        %v173 = vlaneseq
        %v174 = vshrl.u32 %v173, 7
        %v175 = vsub.s32 4, %v174
        %v176 = vrot.slane %v166, %v175
        %v177 = vlaneseq
        %v178 = vshrl.u32 %v177, 7
        %v179 = vsub.s32 4, %v178
        %v180 = vrot.slane %v168, %v179
        %v181 = vmul.f32 %v164, %v172
        %v182 = vmul.f32 %v166, %v176
        %v183 = vmul.f32 %v168, %v180
        %vm184 = vcmp.gt.f32.partialorder %v164, 0.3
        %vm185 = vcmp.gt.f32.partialorder %v166, 0.3
        %vm186 = vcmp.gt.f32.partialorder %v168, 0.3
        %v187 = vsel %vm184, %v181, -1.0
        %v188 = vsel %vm185, %v182, -1.0
        %v189 = vsel %vm186, %v183, -1.0
        %v190 = vpack.c.bf16 %v187, %v187
        %v191 = vpack.c.bf16 %v188, %v188
        %v192 = vpack.c.bf16 %v189, %v189
        %v196 = vcombine.low %v190, %v191
        %v198 = vunpack.c.l.s4 1983009808
        %v199 = vunpack.c.0.s8 %v198
        %v200 = vlaneseq
        %v201 = vshrl.u32 %v200, 7
        %v202 = vsub.s32 %v199, %v201
        %v203 = vrot.slane %v196, %v202
        %v205 = vunpack.c.l.s4 1983009808
        %v206 = vunpack.c.0.s8 %v205
        %v207 = vlaneseq
        %v208 = vshrl.u32 %v207, 7
        %v209 = vsub.s32 %v206, %v208
        %v210 = vrot.slane %v192, %v209
        %v211 = vcombine.low %v203, %v210
        %213 = vst [vmem:[%s134] sm:$0x3f] %v211
        %s214 = sand.u32 %s65, 1
        %s215 = scalar_lea.sflag [#allocation3], %s214
        %s216 = sand.u32 %s65, 1
        %s217 = smul.addr %s216, 6
        %s218 = scalar_lea.vmem [#allocation2], %s217
        // Predicated region
        $region25: #{tpu_custom_call.1} parent=23 // pred_check
          %p219 = pneg %p75
        $region26: #{tpu_custom_call.1} parent=23 // pred_check_branch
          %221 = sbr.rel (%p219) target = $region28
        $region27: #{tpu_custom_call.1} parent=23 // pred_region
          %s222 = smul.u32 3, %s20
          %s224 = ssub.s32 96, 96
          %225 = vsyncadd %s215, %s224
          %s226 = smul.addr %s19, 3
          %s227 = sadd.s32 %s222, %s226
          %s228 = smul.addr %s227, 32
          %s229 = scalar_lea.hbm %s1, %s228
          %s231 = sshll.u32 %s218, 4
          %s232 = int_to_ptr.vmem [resolvable:$true] %s231
          %234 = dma.vmem_to_hbm [thread:$0]  %s232, 96, %s229, %s215
        $region28: #{tpu_custom_call.1} parent=23 // pred_fallthru
          _
      $region24: #{tpu_custom_call.1} parent=5 // pred_fallthru
        _
      %p235 = scmp.le.s32.totalorder 2, %s10
      // Predicated region
      $region29: #{tpu_custom_call.1} parent=5 // pred_check
        %p236 = pneg %p235
      $region30: #{tpu_custom_call.1} parent=5 // pred_check_branch
        %238 = sbr.rel (%p236) target = $region32
      $region31: #{tpu_custom_call.1} parent=5 // pred_region
        %s239 = ssub.s32 %s10, 2
        // Predicated region
        $region33: #{tpu_custom_call.1} parent=31 // pred_check
          %p240 = pneg %p81
        $region34: #{tpu_custom_call.1} parent=31 // pred_check_branch
          %242 = sbr.rel (%p240) target = $region36
        $region35: #{tpu_custom_call.1} parent=31 // pred_region
          %s243 = sand.u32 %s66, 1
          %s244 = scalar_lea.sflag [#allocation3], %s243
          %s245 = sand.u32 %s66, 1
          %s246 = smul.addr %s245, 6
          %s247 = scalar_lea.vmem [#allocation2], %s246
          %248 = dma.done %s244, 96
        $region36: #{tpu_custom_call.1} parent=31 // pred_fallthru
          _
      $region32: #{tpu_custom_call.1} parent=5 // pred_fallthru
        _
    $region6: #{tpu_custom_call.1} parent=1 // loop_footer
      %s14 = sadd.s32 1, %s10
    $region7: #{tpu_custom_call.1} parent=1 // loop_footer_branch
      %9 = sbr.rel target = $region3
    $region8: #{tpu_custom_call.1} parent=1 // loop_exit
      _
    %249 = vsyncpa [#allocation3], 1
    %s250 = scalar_lea.sflag [#allocation3], 1
    %251 = vsyncpa %s250, 1

</llo_original>
